<compile_context>
chip_gen: v7x
topology: tpu7x:2x2x1
jax: 0.10.0
libtpu: 0.0.40
codegen_flags: <defaults>
</compile_context>

<pallas_src>
import jax
import jax.numpy as jnp
from jax.experimental import pallas as pl
from jax.experimental.pallas import tpu as pltpu


def _round_up(x, m):
    return ((x + m - 1) // m) * m


def _mlp_kernel(x_ref, w1_ref, b1_ref, w2_ref, b2_ref, o_ref):
    """Fused 2-layer MLP with ReLU after each layer (Dropout = identity / eval).

    x_ref  : [TM, Din]  compute dtype  (row tile of flattened inputs)
    w1_ref : [Din, H]   compute dtype  (resident)
    b1_ref : [1, H]     f32            (resident)
    w2_ref : [H, H]     compute dtype  (resident)
    b2_ref : [1, H]     f32            (resident)
    o_ref  : [TM, H]    out dtype      (only the real H columns ever hit HBM)
    """
    x = x_ref[...]
    # Layer 1: MXU matmul with f32 accumulation, f32 epilogue (bias + ReLU).
    h = jnp.dot(x, w1_ref[...], preferred_element_type=jnp.float32) + b1_ref[...]
    h = jnp.maximum(h, 0.0)
    # TODO(synk): nn.Dropout is identity at inference; training-mode masking not implemented.
    # Layer 2: cast activations back to the compute dtype for the second MXU pass.
    h = h.astype(w2_ref.dtype)
    y = jnp.dot(h, w2_ref[...], preferred_element_type=jnp.float32) + b2_ref[...]
    y = jnp.maximum(y, 0.0)
    o_ref[...] = y.astype(o_ref.dtype)


def _pick_tm(n_rows, block_rows, row_align):
    """Row-tile size: big (amortize per-step overhead), sublane-aligned, and with
    >= 2 grid steps when possible so v7x's two TensorCores both get work."""
    tm = min(block_rows, _round_up(n_rows, row_align))
    tm = max(row_align, _round_up(tm, row_align))
    if n_rows > row_align and pl.cdiv(n_rows, tm) < 2:
        tm = max(row_align, _round_up(pl.cdiv(n_rows, 2), row_align))
    return tm


def prepare_encoder_params(w1, b1, w2, b2, *, compute_dtype=jnp.bfloat16):
    """Cast/reshape parameters once. Hoist this out of the per-call path when the
    encoder is applied repeatedly (under jit it constant-folds anyway)."""
    return (
        w1.astype(compute_dtype),
        b1.reshape(1, -1).astype(jnp.float32),
        w2.astype(compute_dtype),
        b2.reshape(1, -1).astype(jnp.float32),
    )


def _run_mlp(x_rows, w1c, b1c, w2c, b2c, *, block_rows, out_dtype):
    """Apply the fused MLP to a flat [R, Din] row matrix via a row-tiled grid."""
    R, Din = x_rows.shape
    H = w1c.shape[1]
    compute_dtype = x_rows.dtype

    # bf16 packs 16 rows per vreg sublane group; f32 packs 8.
    row_align = 16 if compute_dtype == jnp.bfloat16 else 8
    tm = _pick_tm(R, block_rows, row_align)
    grid = (pl.cdiv(R, tm),)  # ragged last tile handled by Pallas (no jnp.pad pass)

    # VMEM budget: double-buffered x / out tiles + resident weights + f32 slack
    # for the intermediate activations. Capped well under v7x's 64 MiB physical.
    def _isz(dt):
        return jnp.dtype(dt).itemsize

    vmem_bytes = (
        2 * tm * Din * _isz(compute_dtype)          # streamed x tiles (x2 buffers)
        + 2 * tm * H * _isz(out_dtype)              # streamed out tiles (x2 buffers)
        + 2 * (Din * H + H * H) * _isz(compute_dtype)  # resident weights
        + 4 * H * 4                                 # biases
        + 4 * tm * H * 4                            # f32 intermediates / headroom
    )
    vmem_limit = int(min(48 * 1024 * 1024, max(16 * 1024 * 1024, 2 * vmem_bytes)))

    return pl.pallas_call(
        _mlp_kernel,
        out_shape=jax.ShapeDtypeStruct((R, H), out_dtype),
        grid=grid,
        in_specs=[
            pl.BlockSpec((tm, Din), lambda i: (i, 0)),   # streamed row tiles
            pl.BlockSpec((Din, H), lambda i: (0, 0)),    # resident W1
            pl.BlockSpec((1, H), lambda i: (0, 0)),      # resident b1
            pl.BlockSpec((H, H), lambda i: (0, 0)),      # resident W2
            pl.BlockSpec((1, H), lambda i: (0, 0)),      # resident b2
        ],
        out_specs=pl.BlockSpec((tm, H), lambda i: (i, 0)),
        compiler_params=pltpu.CompilerParams(
            dimension_semantics=("parallel",),           # shard row tiles across TCs
            vmem_limit_bytes=vmem_limit,
        ),
    )(x_rows, w1c, b1c, w2c, b2c)


def element_encoder_fwd(xQ, xA, w1, b1, w2, b2, *, block_rows=4096,
                        compute_dtype=jnp.bfloat16, out_dtype=jnp.bfloat16):
    """ElementEncoder.forward: returns (eQ, eA) = (mlp(xQ), mlp(xA)).

    xQ: [..., Din], xA: [..., Din]; w1: [Din, H], b1: [H], w2: [H, H], b2: [H].
    Use compute_dtype=out_dtype=jnp.float32 for strict parity with the f32 module.
    """
    Din, H = w1.shape
    w1c, b1c, w2c, b2c = prepare_encoder_params(
        w1, b1, w2, b2, compute_dtype=compute_dtype)

    # Cast to the (narrow) compute dtype BEFORE flatten/concat so the one
    # wrapper-side HBM pass over the inputs runs at bf16 width, then fuse both
    # streams into a single row matrix so one pipelined kernel pass covers them.
    q_rows = xQ.reshape(-1, Din).astype(compute_dtype)
    a_rows = xA.reshape(-1, Din).astype(compute_dtype)
    nq = q_rows.shape[0]
    x_rows = jnp.concatenate([q_rows, a_rows], axis=0)

    y = _run_mlp(x_rows, w1c, b1c, w2c, b2c,
                 block_rows=block_rows, out_dtype=out_dtype)

    eQ = y[:nq].reshape(xQ.shape[:-1] + (H,))
    eA = y[nq:].reshape(xA.shape[:-1] + (H,))
    return eQ, eA


def _reference_mlp(x, w1, b1, w2, b2):
    h = jnp.maximum(x @ w1 + b1, 0.0)
    return jnp.maximum(h @ w2 + b2, 0.0)


if __name__ == "__main__":
    # Small deterministic shapes consistent with the module:
    #   wVecDim (in_dimension) = 32, embDim (hidden_dim) = 32,
    #   xQ / xA: [batch=2, seq=8, wVecDim].
    B, N, DIN, H = 2, 8, 32, 32

    key = jax.random.PRNGKey(0)
    k_q, k_a, k_w1, k_b1, k_w2, k_b2 = jax.random.split(key, 6)

    xQ = jax.random.normal(k_q, (B, N, DIN), dtype=jnp.float32)
    xA = jax.random.normal(k_a, (B, N, DIN), dtype=jnp.float32)
    w1 = jax.random.normal(k_w1, (DIN, H), dtype=jnp.float32) * 0.1
    b1 = jax.random.normal(k_b1, (H,), dtype=jnp.float32) * 0.1
    w2 = jax.random.normal(k_w2, (H, H), dtype=jnp.float32) * 0.1
    b2 = jax.random.normal(k_b2, (H,), dtype=jnp.float32) * 0.1

    fwd = jax.jit(element_encoder_fwd,
                  static_argnames=("block_rows", "compute_dtype", "out_dtype"))

    # Fast (default) path: bf16 MXU inputs + bf16 output.
    eQ, eA = fwd(xQ, xA, w1, b1, w2, b2)
    jax.block_until_ready((eQ, eA))

    # Parity path: f32 compute + f32 output.
    eQ32, eA32 = fwd(xQ, xA, w1, b1, w2, b2,
                     compute_dtype=jnp.float32, out_dtype=jnp.float32)
    jax.block_until_ready((eQ32, eA32))

    eQ_ref = _reference_mlp(xQ, w1, b1, w2, b2)
    eA_ref = _reference_mlp(xA, w1, b1, w2, b2)

    assert eQ.shape == (B, N, H) and eA.shape == (B, N, H)
    assert eQ32.shape == (B, N, H) and eA32.shape == (B, N, H)
    # bf16 weights/activations/output -> loose tolerance vs f32 reference.
    assert jnp.allclose(eQ.astype(jnp.float32), eQ_ref, atol=5e-2, rtol=5e-2), "eQ (bf16) mismatch"
    assert jnp.allclose(eA.astype(jnp.float32), eA_ref, atol=5e-2, rtol=5e-2), "eA (bf16) mismatch"
    # f32 path: tighter (tolerance still allows for MXU default matmul precision).
    assert jnp.allclose(eQ32, eQ_ref, atol=2e-2, rtol=2e-2), "eQ (f32) mismatch"
    assert jnp.allclose(eA32, eA_ref, atol=2e-2, rtol=2e-2), "eA (f32) mismatch"

    print("KERNEL_OK")
</pallas_src>

<mosaic_0001>
module attributes {stable_mosaic.version = 11 : i64} {
  func.func @_mlp_kernel(%arg0: i32, %arg1: memref<16x32xbf16, #tpu.memory_space<vmem>>, %arg2: memref<32x32xbf16, #tpu.memory_space<vmem>>, %arg3: memref<1x32xf32, #tpu.memory_space<vmem>>, %arg4: memref<32x32xbf16, #tpu.memory_space<vmem>>, %arg5: memref<1x32xf32, #tpu.memory_space<vmem>>, %arg6: memref<16x32xbf16, #tpu.memory_space<vmem>>) attributes {dimension_semantics = [#tpu.dimension_semantics<parallel>], iteration_bounds = array<i64: 2>, scalar_prefetch = 0 : i64, scratch_operands = 0 : i64, tpu.core_type = #tpu.core_type<tc>, window_params = [{transform_indices = @transform_0, window_bounds = array<i64: 16, 32>}, {pipeline_mode = #tpu.pipeline_mode<synchronous>, transform_indices = @transform_1, window_bounds = array<i64: 32, 32>}, {pipeline_mode = #tpu.pipeline_mode<synchronous>, transform_indices = @transform_2, window_bounds = array<i64: 1, 32>}, {pipeline_mode = #tpu.pipeline_mode<synchronous>, transform_indices = @transform_3, window_bounds = array<i64: 32, 32>}, {pipeline_mode = #tpu.pipeline_mode<synchronous>, transform_indices = @transform_4, window_bounds = array<i64: 1, 32>}, {transform_indices = @transform_5, window_bounds = array<i64: 16, 32>}]} {
    %c0 = arith.constant 0 : index
    %c0_0 = arith.constant 0 : index
    %0 = vector.load %arg1[%c0, %c0_0] : memref<16x32xbf16, #tpu.memory_space<vmem>>, vector<16x32xbf16>
    %c0_1 = arith.constant 0 : index
    %c0_2 = arith.constant 0 : index
    %1 = vector.load %arg2[%c0_1, %c0_2] : memref<32x32xbf16, #tpu.memory_space<vmem>>, vector<32x32xbf16>
    %cst = arith.constant dense<0.000000e+00> : vector<16x32xf32>
    %2 = tpu.matmul %0, %1, %cst {dimension_numbers = #tpu.dot_dimension_numbers<[1], [0], [0], [1], [0, 0, 1, 1], [], []>} : vector<16x32xbf16>, vector<32x32xbf16>, vector<16x32xf32> -> vector<16x32xf32>
    %c0_3 = arith.constant 0 : index
    %c0_4 = arith.constant 0 : index
    %3 = vector.load %arg3[%c0_3, %c0_4] : memref<1x32xf32, #tpu.memory_space<vmem>>, vector<1x32xf32>
    %4 = vector.broadcast %3 : vector<1x32xf32> to vector<16x32xf32>
    %5 = arith.addf %2, %4 : vector<16x32xf32>
    %cst_5 = arith.constant 0.000000e+00 : f32
    %6 = vector.broadcast %cst_5 : f32 to vector<16x32xf32>
    %7 = arith.maximumf %5, %6 : vector<16x32xf32>
    %8 = arith.truncf %7 : vector<16x32xf32> to vector<16x32xbf16>
    %c0_6 = arith.constant 0 : index
    %c0_7 = arith.constant 0 : index
    %9 = vector.load %arg4[%c0_6, %c0_7] : memref<32x32xbf16, #tpu.memory_space<vmem>>, vector<32x32xbf16>
    %cst_8 = arith.constant dense<0.000000e+00> : vector<16x32xf32>
    %10 = tpu.matmul %8, %9, %cst_8 {dimension_numbers = #tpu.dot_dimension_numbers<[1], [0], [0], [1], [0, 0, 1, 1], [], []>} : vector<16x32xbf16>, vector<32x32xbf16>, vector<16x32xf32> -> vector<16x32xf32>
    %c0_9 = arith.constant 0 : index
    %c0_10 = arith.constant 0 : index
    %11 = vector.load %arg5[%c0_9, %c0_10] : memref<1x32xf32, #tpu.memory_space<vmem>>, vector<1x32xf32>
    %12 = vector.broadcast %11 : vector<1x32xf32> to vector<16x32xf32>
    %13 = arith.addf %10, %12 : vector<16x32xf32>
    %cst_11 = arith.constant 0.000000e+00 : f32
    %14 = vector.broadcast %cst_11 : f32 to vector<16x32xf32>
    %15 = arith.maximumf %13, %14 : vector<16x32xf32>
    %16 = arith.truncf %15 : vector<16x32xf32> to vector<16x32xbf16>
    %c0_12 = arith.constant 0 : index
    %c0_13 = arith.constant 0 : index
    %17 = vector.load %arg6[%c0_12, %c0_13] : memref<16x32xbf16, #tpu.memory_space<vmem>>, vector<16x32xbf16>
    tpu.vector_store %arg6[%c0_12, %c0_13], %16 {strides = array<i32>} : memref<16x32xbf16, #tpu.memory_space<vmem>>, vector<16x32xbf16>,
    return
  }
  func.func @transform_0(%arg0: i32) -> (i32, i32) {
    %c0_i32 = arith.constant 0 : i32
    %c0_i32_0 = arith.constant 0 : i32
    return %arg0, %c0_i32 : i32, i32
  }
  func.func @transform_1(%arg0: i32) -> (i32, i32) {
    %c0_i32 = arith.constant 0 : i32
    %c0_i32_0 = arith.constant 0 : i32
    %c0_i32_1 = arith.constant 0 : i32
    return %c0_i32, %c0_i32_0 : i32, i32
  }
  func.func @transform_2(%arg0: i32) -> (i32, i32) {
    %c0_i32 = arith.constant 0 : i32
    %c0_i32_0 = arith.constant 0 : i32
    %c0_i32_1 = arith.constant 0 : i32
    return %c0_i32, %c0_i32_0 : i32, i32
  }
  func.func @transform_3(%arg0: i32) -> (i32, i32) {
    %c0_i32 = arith.constant 0 : i32
    %c0_i32_0 = arith.constant 0 : i32
    %c0_i32_1 = arith.constant 0 : i32
    return %c0_i32, %c0_i32_0 : i32, i32
  }
  func.func @transform_4(%arg0: i32) -> (i32, i32) {
    %c0_i32 = arith.constant 0 : i32
    %c0_i32_0 = arith.constant 0 : i32
    %c0_i32_1 = arith.constant 0 : i32
    return %c0_i32, %c0_i32_0 : i32, i32
  }
  func.func @transform_5(%arg0: i32) -> (i32, i32) {
    %c0_i32 = arith.constant 0 : i32
    %c0_i32_0 = arith.constant 0 : i32
    return %arg0, %c0_i32 : i32, i32
  }
}

</mosaic_0001>

<llo_original>
// kernel: element_encoder_fwd.1
$region0: #{element_encoder_fwd.1}
  #allocation0 [shape = 'u32[]', space=smem, size = 0x4, offset = 0x4, fixed_abs, tag = 'smem constant byte address 0x4 - core index']
  #allocation1 [shape = 'u32[144,128]{1,0:T(1,128)}', space=vmem, size = 0x12000, scoped, tag = 'internal scratch']
  %s0 = inlined_call_operand.vmem [shape: bf16[32,32], index: 0, kind: input, shape index: {}]
  %s1 = inlined_call_operand.vmem [shape: bf16[32,32], index: 1, kind: input, shape index: {}]
  %s2 = inlined_call_operand.vmem [shape: f32[1,32], index: 2, kind: input, shape index: {}]
  %s3 = inlined_call_operand.vmem [shape: bf16[32,32], index: 3, kind: input, shape index: {}]
  %s4 = inlined_call_operand.vmem [shape: f32[1,32], index: 4, kind: input, shape index: {}]
  %s5 = inlined_call_operand.vmem [shape: bf16[32,32], index: 5, kind: output, shape index: {}]
  %s6 = sld [smem:[#allocation0]]
  $region53: #{element_encoder_fwd.1} parent=0
    _
  %s8 = ssub.s32 1, %s6
  %s9 = scalar_select 0, %s8, %s6
  loop: start=0, step=1, limit=4
  $region2: #{element_encoder_fwd.1} parent=0 // loop_pre_header
    _
  $region3: #{element_encoder_fwd.1} parent=0 // loop_header
    %s11 = sphi 0, %s15
    %p12 = scmp.ge.s32.totalorder %s11, 4
    %s21 = sphi 0, %s23
    %s24 = sphi 0, %s21
    %s25 = sphi 0, %s24
    %s41 = sphi 0, %s25
    %s45 = sphi 0, %s45
    %s47 = sphi 0, %s45
    %s48 = sphi 0, %s47
    %s62 = sphi 0, %s48
    %s66 = sphi 0, %s66
    %s68 = sphi 0, %s66
    %s69 = sphi 0, %s68
    %s83 = sphi 0, %s69
    %s87 = sphi 0, %s87
    %s89 = sphi 0, %s87
    %s90 = sphi 0, %s89
    %s104 = sphi 0, %s90
    %s108 = sphi 0, %s108
    %s110 = sphi 0, %s108
    %s111 = sphi 0, %s110
    %s125 = sphi 0, %s111
    %s131 = sphi 0, %s133
    %s134 = sphi 0, %s131
    %s135 = sphi 0, %s134
    %s151 = sphi 0, %s135
  $region4: #{element_encoder_fwd.1} parent=0 // loop_header_branch
    %14 = sbr.rel (%p12) target = $region8
  $region5: #{element_encoder_fwd.1} parent=0 // loop_body
    %s16 = ssub.s32 %s11, 1
    %s17 = ssub.s32 %s11, 2
    %s18 = sadd.s32 %s11, 1
    %s19 = ssub.s32 %s11, %s18
    %p20 = scmp.eq.s32.totalorder %s19, 0
    %s22 = sadd.s32 %s21, 1
    %s23 = scalar_select %p20, %s21, %s22
    %p26 = pneg %p20
    %p27 = scmp.eq.s32.totalorder %s11, 1
    %p28 = por %p26, %p27
    %p29 = scmp.ne.s32.totalorder %s21, %s24
    %p30 = scmp.eq.s32.totalorder %s11, 0
    %p31 = por %p29, %p30
    %p32 = scmp.ne.s32.totalorder %s21, %s24
    %p33 = scmp.eq.s32.totalorder %s16, 1
    %p34 = por %p32, %p33
    %p35 = scmp.ne.s32.totalorder %s24, %s25
    %p36 = scmp.eq.s32.totalorder %s16, 0
    %p37 = por %p35, %p36
    %p38 = scmp.ne.s32.totalorder %s24, %s25
    %p39 = scmp.eq.s32.totalorder %s17, 1
    %p40 = por %p38, %p39
    %p42 = scmp.ne.s32.totalorder %s25, %s41
    %p43 = scmp.eq.s32.totalorder %s17, 0
    %p44 = por %p42, %p43
    %s46 = sadd.s32 %s45, 1
    %p49 = scmp.eq.s32.totalorder %s11, 1
    %p50 = scmp.ne.s32.totalorder %s45, %s47
    %p51 = scmp.eq.s32.totalorder %s11, 0
    %p52 = por %p50, %p51
    %p53 = scmp.ne.s32.totalorder %s45, %s47
    %p54 = scmp.eq.s32.totalorder %s16, 1
    %p55 = por %p53, %p54
    %p56 = scmp.ne.s32.totalorder %s47, %s48
    %p57 = scmp.eq.s32.totalorder %s16, 0
    %p58 = por %p56, %p57
    %p59 = scmp.ne.s32.totalorder %s47, %s48
    %p60 = scmp.eq.s32.totalorder %s17, 1
    %p61 = por %p59, %p60
    %p63 = scmp.ne.s32.totalorder %s48, %s62
    %p64 = scmp.eq.s32.totalorder %s17, 0
    %p65 = por %p63, %p64
    %s67 = sadd.s32 %s66, 1
    %p70 = scmp.eq.s32.totalorder %s11, 1
    %p71 = scmp.ne.s32.totalorder %s66, %s68
    %p72 = scmp.eq.s32.totalorder %s11, 0
    %p73 = por %p71, %p72
    %p74 = scmp.ne.s32.totalorder %s66, %s68
    %p75 = scmp.eq.s32.totalorder %s16, 1
    %p76 = por %p74, %p75
    %p77 = scmp.ne.s32.totalorder %s68, %s69
    %p78 = scmp.eq.s32.totalorder %s16, 0
    %p79 = por %p77, %p78
    %p80 = scmp.ne.s32.totalorder %s68, %s69
    %p81 = scmp.eq.s32.totalorder %s17, 1
    %p82 = por %p80, %p81
    %p84 = scmp.ne.s32.totalorder %s69, %s83
    %p85 = scmp.eq.s32.totalorder %s17, 0
    %p86 = por %p84, %p85
    %s88 = sadd.s32 %s87, 1
    %p91 = scmp.eq.s32.totalorder %s11, 1
    %p92 = scmp.ne.s32.totalorder %s87, %s89
    %p93 = scmp.eq.s32.totalorder %s11, 0
    %p94 = por %p92, %p93
    %p95 = scmp.ne.s32.totalorder %s87, %s89
    %p96 = scmp.eq.s32.totalorder %s16, 1
    %p97 = por %p95, %p96
    %p98 = scmp.ne.s32.totalorder %s89, %s90
    %p99 = scmp.eq.s32.totalorder %s16, 0
    %p100 = por %p98, %p99
    %p101 = scmp.ne.s32.totalorder %s89, %s90
    %p102 = scmp.eq.s32.totalorder %s17, 1
    %p103 = por %p101, %p102
    %p105 = scmp.ne.s32.totalorder %s90, %s104
    %p106 = scmp.eq.s32.totalorder %s17, 0
    %p107 = por %p105, %p106
    %s109 = sadd.s32 %s108, 1
    %p112 = scmp.eq.s32.totalorder %s11, 1
    %p113 = scmp.ne.s32.totalorder %s108, %s110
    %p114 = scmp.eq.s32.totalorder %s11, 0
    %p115 = por %p113, %p114
    %p116 = scmp.ne.s32.totalorder %s108, %s110
    %p117 = scmp.eq.s32.totalorder %s16, 1
    %p118 = por %p116, %p117
    %p119 = scmp.ne.s32.totalorder %s110, %s111
    %p120 = scmp.eq.s32.totalorder %s16, 0
    %p121 = por %p119, %p120
    %p122 = scmp.ne.s32.totalorder %s110, %s111
    %p123 = scmp.eq.s32.totalorder %s17, 1
    %p124 = por %p122, %p123
    %p126 = scmp.ne.s32.totalorder %s111, %s125
    %p127 = scmp.eq.s32.totalorder %s17, 0
    %p128 = por %p126, %p127
    %s129 = ssub.s32 %s11, %s18
    %p130 = scmp.eq.s32.totalorder %s129, 0
    %s132 = sadd.s32 %s131, 1
    %s133 = scalar_select %p130, %s131, %s132
    %p136 = pneg %p130
    %p137 = scmp.eq.s32.totalorder %s11, 1
    %p138 = por %p136, %p137
    %p139 = scmp.ne.s32.totalorder %s131, %s134
    %p140 = scmp.eq.s32.totalorder %s11, 0
    %p141 = por %p139, %p140
    %p142 = scmp.ne.s32.totalorder %s131, %s134
    %p143 = scmp.eq.s32.totalorder %s16, 1
    %p144 = por %p142, %p143
    %p145 = scmp.ne.s32.totalorder %s134, %s135
    %p146 = scmp.eq.s32.totalorder %s16, 0
    %p147 = por %p145, %p146
    %p148 = scmp.ne.s32.totalorder %s134, %s135
    %p149 = scmp.eq.s32.totalorder %s17, 1
    %p150 = por %p148, %p149
    %p152 = scmp.ne.s32.totalorder %s135, %s151
    %p153 = scmp.eq.s32.totalorder %s17, 0
    %p154 = por %p152, %p153
    %p155 = scmp.le.s32.totalorder 1, %s11
    %p156 = scmp.lt.s32.totalorder %s11, 3
    %p157 = pnand %p155, %p156
    %p158 = pneg %p157
    // Predicated region
    $region9: #{element_encoder_fwd.1} parent=5 // pred_check
      _
    $region10: #{element_encoder_fwd.1} parent=5 // pred_check_branch
      %160 = sbr.rel (%p157) target = $region12
    $region11: #{element_encoder_fwd.1} parent=5 // pred_region
      %s161 = ssub.s32 %s11, 1
      // Predicated region
      $region13: #{element_encoder_fwd.1} parent=11 // pred_check
        %p162 = pneg %p58
      $region14: #{element_encoder_fwd.1} parent=11 // pred_check_branch
        %164 = sbr.rel (%p162) target = $region16
      $region15: #{element_encoder_fwd.1} parent=11 // pred_region
        _
      $region16: #{element_encoder_fwd.1} parent=11 // pred_fallthru
        _
      // Predicated region
      $region17: #{element_encoder_fwd.1} parent=11 // pred_check
        %p165 = pneg %p79
      $region18: #{element_encoder_fwd.1} parent=11 // pred_check_branch
        %167 = sbr.rel (%p165) target = $region20
      $region19: #{element_encoder_fwd.1} parent=11 // pred_region
        _
      $region20: #{element_encoder_fwd.1} parent=11 // pred_fallthru
        _
      // Predicated region
      $region21: #{element_encoder_fwd.1} parent=11 // pred_check
        %p168 = pneg %p100
      $region22: #{element_encoder_fwd.1} parent=11 // pred_check_branch
        %170 = sbr.rel (%p168) target = $region24
      $region23: #{element_encoder_fwd.1} parent=11 // pred_region
        _
      $region24: #{element_encoder_fwd.1} parent=11 // pred_fallthru
        _
      // Predicated region
      $region25: #{element_encoder_fwd.1} parent=11 // pred_check
        %p171 = pneg %p121
      $region26: #{element_encoder_fwd.1} parent=11 // pred_check_branch
        %173 = sbr.rel (%p171) target = $region28
      $region27: #{element_encoder_fwd.1} parent=11 // pred_region
        _
      $region28: #{element_encoder_fwd.1} parent=11 // pred_fallthru
        _
    $region12: #{element_encoder_fwd.1} parent=5 // pred_fallthru
      _
    %p174 = scmp.lt.s32.totalorder %s11, 2
    // Predicated region
    $region29: #{element_encoder_fwd.1} parent=5 // pred_check
      %p175 = pneg %p174
    $region30: #{element_encoder_fwd.1} parent=5 // pred_check_branch
      %177 = sbr.rel (%p175) target = $region32
    $region31: #{element_encoder_fwd.1} parent=5 // pred_region
      // Predicated region
      $region33: #{element_encoder_fwd.1} parent=31 // pred_check
        %p178 = pneg %p31
      $region34: #{element_encoder_fwd.1} parent=31 // pred_check_branch
        %180 = sbr.rel (%p178) target = $region36
      $region35: #{element_encoder_fwd.1} parent=31 // pred_region
        %s181 = smul.u32 2, %s11
        %p182 = scmp.lt.s32.totalorder %s181, 3
        %s183 = scalar_select %p182, %s181, 3
        %s184 = smul.addr %s183, 4
        %s185 = scalar_lea.vmem %s0, %s184
        %s186 = smul.u32 2, %s11
      $region36: #{element_encoder_fwd.1} parent=31 // pred_fallthru
        _
    $region32: #{element_encoder_fwd.1} parent=5 // pred_fallthru
      _
    %p187 = scmp.le.s32.totalorder 1, %s11
    %p188 = scmp.lt.s32.totalorder %s11, 3
    %p189 = pnand %p187, %p188
    %p190 = pneg %p189
    // Predicated region
    $region37: #{element_encoder_fwd.1} parent=5 // pred_check
      _
    $region38: #{element_encoder_fwd.1} parent=5 // pred_check_branch
      %192 = sbr.rel (%p189) target = $region40
    $region39: #{element_encoder_fwd.1} parent=5 // pred_region
      %s193 = ssub.s32 %s11, 1
      %s194 = smul.u32 2, %s16
      %p195 = scmp.lt.s32.totalorder %s194, 3
      %s196 = scalar_select %p195, %s194, 3
      %s197 = smul.addr %s196, 4
      %s198 = scalar_lea.vmem %s0, %s197
      %p199 = pneg %p37
      %p200 = pneg %p34
      %p201 = pneg %p58
      %p202 = pneg %p55
      %p203 = pneg %p79
      %p204 = pneg %p76
      %p205 = pneg %p100
      %p206 = pneg %p97
      %p207 = pneg %p121
      %p208 = pneg %p118
      %p209 = pneg %p147
      %p210 = pneg %p144
      %s211 = smul.u32 2, %s16
      %p212 = scmp.lt.s32.totalorder %s211, 3
      %s213 = scalar_select %p212, %s211, 3
      %s214 = smul.addr %s213, 4
      %s215 = scalar_lea.vmem %s5, %s214
      %s216 = smul.u32 2, %s16
      %p217 = scmp.lt.s32.totalorder %s216, 3
      %s218 = scalar_select %p217, %s216, 3
      %s219 = smul.addr %s218, 4
      %s220 = scalar_lea.vmem %s0, %s219
      %s221 = smul.u32 2, %s16
      %s222 = smul.u32 2, %s16
      %p223 = scmp.lt.s32.totalorder %s222, 3
      %s224 = scalar_select %p223, %s222, 3
      %s225 = smul.addr %s224, 4
      %s226 = scalar_lea.vmem %s5, %s225
      %s227 = smul.u32 2, %s16
      %v229 = vld [vmem:[%s220] sm:$0xf]
      %v230 = vld [vmem:[%s220 + $0x4] sm:$0xf]
      %v231 = vld [vmem:[%s1] sm:$0xf]
      %v232 = vld [vmem:[%s1 + $0x4] sm:$0xf]
      %v233 = vld [vmem:[%s1 + $0x8] sm:$0xf]
      %v234 = vld [vmem:[%s1 + $0xc] sm:$0xf]
      %v235 = vld [vmem:[%s2] sm:$0x1]
      %v237 = vlaneseq
      %v238 = vshrl.u32 %v237, 7
      %v239 = vsub.s32 0, %v238
      %v240 = vrot.slane %v235, %v239
      %v244 = vunpack.c.l.b16 %v229
      %v245 = vunpack.c.l.b16 %v230
      %v246 = vpack.c.b16 %v245, %v244
      %v251 = vunpack.c.l.b16 %v231
      %v252 = vunpack.c.l.b16 %v232
      %v253 = vunpack.c.l.b16 %v233
      %v254 = vunpack.c.l.b16 %v234
      %v255 = vpack.c.b16 %v252, %v251
      %v256 = vpack.c.b16 %v254, %v253
      %vm259 = vcmask 261120
      %v261 = vsel %vm259, %v246, 0
      %263 = vmatprep.subr.bf16.mxu0 0
      %264 = vmatpush1.bf16.msra.mxu0 %v255
      %265 = vmatprep.subr.bf16.mxu0 0
      %266 = vmatpush1.bf16.msra.mxu0 %v256
      %267 = vmatprep.subr.bf16.mxu0 0
      %268 = vmatpush1.bf16.msra.mxu0 0
      %269 = vmatprep.subr.bf16.mxu0 0
      %270 = vmatpush1.bf16.msra.mxu0 0
      %271 = vmatprep.subr.bf16.mxu0 0
      %272 = vmatpush1.bf16.msra.mxu0 0
      %273 = vmatprep.subr.bf16.mxu0 0
      %274 = vmatpush1.bf16.msra.mxu0 0
      %275 = vmatprep.subr.bf16.mxu0 0
      %276 = vmatpush1.bf16.msra.mxu0 0
      %277 = vmatprep.subr.bf16.mxu0 0
      %278 = vmatpush1.bf16.msra.mxu0 0
      %279 = vmatprep.subr.bf16.mxu0 0
      %280 = vmatpush1.bf16.msra.mxu0 0
      %281 = vmatprep.subr.bf16.mxu0 0
      %282 = vmatpush1.bf16.msra.mxu0 0
      %283 = vmatprep.subr.bf16.mxu0 0
      %284 = vmatpush1.bf16.msra.mxu0 0
      %285 = vmatprep.subr.bf16.mxu0 0
      %286 = vmatpush1.bf16.msra.mxu0 0
      %287 = vmatprep.subr.bf16.mxu0 0
      %288 = vmatpush1.bf16.msra.mxu0 0
      %289 = vmatprep.subr.bf16.mxu0 0
      %290 = vmatpush1.bf16.msra.mxu0 0
      %291 = vmatprep.subr.bf16.mxu0 0
      %292 = vmatpush1.bf16.msra.mxu0 0
      %293 = vmatprep.subr.bf16.mxu0 0
      %294 = vmatpush1.bf16.msra.mxu0 0
      %295 = vmatprep.mubr.bf16.mxu0 0
      %296 = vmatmul.mubr.bf16.gmra.mrb[0].mxu0 %v261
      %v297 = vpop.f32.mrb[0].mxu0
      %v298 = vadd.f32 %v240, %v297
      %v299 = vpop.f32.mrb[0].mxu0
      %v300 = vpop.f32.mrb[0].mxu0
      %v301 = vadd.f32 %v240, %v300
      %v302 = vpop.f32.mrb[0].mxu0
      %303 = vdwg.mxu0
      %v304 = vmax.f32 %v298, 0.0
      %v305 = vmax.f32 %v301, 0.0
      %v306 = vpack.c.bf16 %v305, %v304
      %v307 = vld [vmem:[%s3] sm:$0xf]
      %v308 = vld [vmem:[%s3 + $0x4] sm:$0xf]
      %v309 = vld [vmem:[%s3 + $0x8] sm:$0xf]
      %v310 = vld [vmem:[%s3 + $0xc] sm:$0xf]
      %v311 = vld [vmem:[%s4] sm:$0x1]
      %v313 = vlaneseq
      %v314 = vshrl.u32 %v313, 7
      %v315 = vsub.s32 0, %v314
      %v316 = vrot.slane %v311, %v315
      %v322 = vunpack.c.l.b16 %v307
      %v323 = vunpack.c.l.b16 %v308
      %v324 = vunpack.c.l.b16 %v309
      %v325 = vunpack.c.l.b16 %v310
      %v326 = vpack.c.b16 %v323, %v322
      %v327 = vpack.c.b16 %v325, %v324
      %v331 = vsel %vm259, %v306, 0
      %333 = vmatprep.subr.bf16.mxu0 0
      %334 = vmatpush1.bf16.msra.mxu0 %v326
      %335 = vmatprep.subr.bf16.mxu0 0
      %336 = vmatpush1.bf16.msra.mxu0 %v327
      %337 = vmatprep.subr.bf16.mxu0 0
      %338 = vmatpush1.bf16.msra.mxu0 0
      %339 = vmatprep.subr.bf16.mxu0 0
      %340 = vmatpush1.bf16.msra.mxu0 0
      %341 = vmatprep.subr.bf16.mxu0 0
      %342 = vmatpush1.bf16.msra.mxu0 0
      %343 = vmatprep.subr.bf16.mxu0 0
      %344 = vmatpush1.bf16.msra.mxu0 0
      %345 = vmatprep.subr.bf16.mxu0 0
      %346 = vmatpush1.bf16.msra.mxu0 0
      %347 = vmatprep.subr.bf16.mxu0 0
      %348 = vmatpush1.bf16.msra.mxu0 0
      %349 = vmatprep.subr.bf16.mxu0 0
      %350 = vmatpush1.bf16.msra.mxu0 0
      %351 = vmatprep.subr.bf16.mxu0 0
      %352 = vmatpush1.bf16.msra.mxu0 0
      %353 = vmatprep.subr.bf16.mxu0 0
      %354 = vmatpush1.bf16.msra.mxu0 0
      %355 = vmatprep.subr.bf16.mxu0 0
      %356 = vmatpush1.bf16.msra.mxu0 0
      %357 = vmatprep.subr.bf16.mxu0 0
      %358 = vmatpush1.bf16.msra.mxu0 0
      %359 = vmatprep.subr.bf16.mxu0 0
      %360 = vmatpush1.bf16.msra.mxu0 0
      %361 = vmatprep.subr.bf16.mxu0 0
      %362 = vmatpush1.bf16.msra.mxu0 0
      %363 = vmatprep.subr.bf16.mxu0 0
      %364 = vmatpush1.bf16.msra.mxu0 0
      %365 = vmatprep.mubr.bf16.mxu0 0
      %366 = vmatmul.mubr.bf16.gmra.mrb[0].mxu0 %v331
      %v367 = vpop.f32.mrb[0].mxu0
      %v368 = vadd.f32 %v316, %v367
      %v369 = vpop.f32.mrb[0].mxu0
      %v370 = vpop.f32.mrb[0].mxu0
      %v371 = vadd.f32 %v316, %v370
      %v372 = vpop.f32.mrb[0].mxu0
      %373 = vdwg.mxu0
      %v374 = vmax.f32 %v368, 0.0
      %v375 = vmax.f32 %v371, 0.0
      %v376 = vpack.c.bf16 %v375, %v374
      %v378 = vunpack.c.l.b16 %v376
      %v379 = vunpack.c.h.b16 %v376
      %v380 = vpack.c.b16 %v378, %v378
      %v381 = vpack.c.b16 %v379, %v379
      %vm384 = vcmask 257024
      %385 = vst.msk [vmem:[%s226] sm:$0xf] %vm384, %v380
      %386 = vst.msk [vmem:[%s226 + $0x4] sm:$0xf] %vm384, %v381
      %s387 = smul.u32 2, %s16
      %p388 = scmp.lt.s32.totalorder %s387, 3
      %s389 = scalar_select %p388, %s387, 3
      %s390 = smul.addr %s389, 4
      %s391 = scalar_lea.vmem %s5, %s390
      // Predicated region
      $region41: #{element_encoder_fwd.1} parent=39 // pred_check
        %p392 = pneg %p144
      $region42: #{element_encoder_fwd.1} parent=39 // pred_check_branch
        %394 = sbr.rel (%p392) target = $region44
      $region43: #{element_encoder_fwd.1} parent=39 // pred_region
        %s395 = smul.u32 2, %s16
      $region44: #{element_encoder_fwd.1} parent=39 // pred_fallthru
        _
    $region40: #{element_encoder_fwd.1} parent=5 // pred_fallthru
      _
    %p396 = scmp.le.s32.totalorder 2, %s11
    // Predicated region
    $region45: #{element_encoder_fwd.1} parent=5 // pred_check
      %p397 = pneg %p396
    $region46: #{element_encoder_fwd.1} parent=5 // pred_check_branch
      %399 = sbr.rel (%p397) target = $region48
    $region47: #{element_encoder_fwd.1} parent=5 // pred_region
      %s400 = ssub.s32 %s11, 2
      // Predicated region
      $region49: #{element_encoder_fwd.1} parent=47 // pred_check
        %p401 = pneg %p150
      $region50: #{element_encoder_fwd.1} parent=47 // pred_check_branch
        %403 = sbr.rel (%p401) target = $region52
      $region51: #{element_encoder_fwd.1} parent=47 // pred_region
        %s404 = smul.u32 2, %s17
        %p405 = scmp.lt.s32.totalorder %s404, 3
        %s406 = scalar_select %p405, %s404, 3
        %s407 = smul.addr %s406, 4
        %s408 = scalar_lea.vmem %s5, %s407
      $region52: #{element_encoder_fwd.1} parent=47 // pred_fallthru
        _
    $region48: #{element_encoder_fwd.1} parent=5 // pred_fallthru
      _
  $region6: #{element_encoder_fwd.1} parent=0 // loop_footer
    %s15 = sadd.s32 1, %s11
  $region7: #{element_encoder_fwd.1} parent=0 // loop_footer_branch
    %10 = sbr.rel target = $region3
  $region8: #{element_encoder_fwd.1} parent=0 // loop_exit
    _

</llo_original>
